<compile_context>
chip_gen: v5e
topology: v5e:2x2
jax: 0.10.0
libtpu: 0.0.40
codegen_flags: <defaults>
</compile_context>

<pallas_src>
import functools

import jax
import jax.numpy as jnp
from jax.experimental import pallas as pl
from jax.experimental.pallas import tpu as pltpu

ALPHA = 0.25
GAMMA = 2.0
NUM_PARTIALS = 2   # leading "parallel" grid axis: both TensorCores on v7x; harmless on v5e/v6e


def _round_up(x: int, m: int) -> int:
    return ((x + m - 1) // m) * m


def _choose_tile(B: int, C: int, itemsize: int) -> int:
    """Lane tile (multiple of 128) over the batch.

    Budget the per-step VMEM footprint: double-buffered pred block (padded to 8
    sublanes), double-buffered (1, tb) int32 target block (also padded to 8 sublanes),
    and the main f32 in-kernel temporaries.  Keep it under ~20 MiB so the kernel sits
    comfortably inside a 32 MiB scoped-VMEM limit on v5e/v6e/v7x while amortizing the
    ~0.35 us fixed per-grid-step overhead with ~1 MiB pred blocks.
    """
    cs = max(8, _round_up(C, 8))                      # sublane padding of the (C, tb) block

    def vmem_est(tb: int) -> int:
        pred_bufs = 2 * cs * tb * itemsize            # double-buffered pred input block
        tgt_bufs = 2 * 8 * tb * 4                     # (1, tb) int32 pads to 8 sublanes
        temps = 2 * cs * tb * 4                       # f32 upcast + exp temporaries
        return pred_bufs + tgt_bufs + temps

    budget = 20 * 1024 * 1024
    tb = 256 * 1024
    while tb > 128 and vmem_est(tb) > budget:
        tb //= 2
    tb = min(tb, _round_up(B, 128))                   # never larger than the (padded) batch
    return max(tb, 128)


def _focal_loss_kernel(pred_ref, tgt_ref, out_ref, *, alpha, gamma, batch,
                       tiles_per_partial):
    p = pl.program_id(0)          # partial-sum slot (a TensorCore on v7x)
    i = pl.program_id(1)          # serial reduction step within this slot

    @pl.when(i == 0)
    def _init():
        out_ref[...] = jnp.zeros_like(out_ref)

    pred = pred_ref[...].astype(jnp.float32)          # (C, TB) lane-dense over batch
    tgt = tgt_ref[...]                                 # (1, TB) int32 labels
    C, tb = pred.shape

    # Virtual (unclamped) tile index of this step.  The index_map clamps the actual DMA
    # to the last real tile, so ragged / overhanging columns are masked out here.
    j = p * tiles_per_partial + i
    lane = jax.lax.broadcasted_iota(jnp.int32, (1, tb), 1)
    valid = (lane + j * tb) < batch                    # (1, TB) bool

    # Sanitize the unspecified tail so no NaN/Inf reaches the masked sum.
    pred = jnp.where(valid, pred, 0.0)
    tgt = jnp.where(valid, tgt, 0)

    # Numerically stable softmax pieces; class reduction over the tiny sublane axis.
    m = jnp.max(pred, axis=0, keepdims=True)           # (1, TB)
    e = jnp.exp(pred - m)                               # (C, TB) single big EUP pass
    sumexp = jnp.sum(e, axis=0, keepdims=True)          # (1, TB)

    # Target-class logit via a static unrolled select chain (C is tiny and static).
    logit_t = pred[0:1, :]
    for c in range(1, C):
        logit_t = jnp.where(tgt == c, pred[c:c + 1, :], logit_t)
    exp_t = jnp.exp(logit_t - m)                        # one extra (1, TB) EUP exp

    ce = jnp.log(sumexp) - (logit_t - m)                # cross entropy, reduction='none'
    p_t = exp_t / sumexp                                # == exp(-ce); no second full-width exp
    one_minus_pt = jnp.maximum(1.0 - p_t, 0.0)          # guard tiny negative rounding

    g = float(gamma)
    if g == 2.0:
        modulator = one_minus_pt * one_minus_pt         # one VPU mul, no pow/exp/log
    elif g == int(g) and g >= 0:
        modulator = one_minus_pt ** int(g)
    else:
        modulator = one_minus_pt ** jnp.float32(g)

    focal = modulator * ce
    if alpha is not None and alpha >= 0:
        # Faithful to the PyTorch expression: uses the raw integer label value
        # (for C > 2 this can make alpha_t negative, exactly like the original module).
        tgt_f = tgt.astype(jnp.float32)
        alpha_t = alpha * tgt_f + (1.0 - alpha) * (1.0 - tgt_f)
        focal = alpha_t * focal

    partial = jnp.sum(jnp.where(valid, focal, 0.0))
    out_ref[...] += partial                              # resident (1,1,128) accumulator block


def focal_loss(pred: jax.Array, target: jax.Array,
               alpha: float = ALPHA, gamma: float = GAMMA,
               tile=None, num_partials: int = NUM_PARTIALS) -> jax.Array:
    """pred: (B, num_classes) float, target: (B,) int -> scalar float32 loss."""
    B, C = pred.shape
    itemsize = jnp.dtype(pred.dtype).itemsize
    tb = _round_up(int(tile), 128) if tile is not None else _choose_tile(B, C, itemsize)
    n_tiles = -(-B // tb)                               # ragged last tile handled in-kernel
    num_partials = max(1, int(num_partials))
    tiles_per_partial = -(-n_tiles // num_partials)

    # Lane-dense layout: batch on the 128-lane axis; pred stays in its native dtype
    # (the kernel upcasts) and there is NO wrapper-side pad pass over pred.
    # TODO(synk): also remove the transpose pass by keeping the natural (B, C) order
    # reshaped contiguously to (B*C/128, 128) with segmented in-kernel class reductions
    # (pltpu.roll + selects); bigger restructure, prototyped separately.
    pred_t = jnp.transpose(pred)                        # (C, B)
    tgt = target if target.dtype == jnp.int32 else target.astype(jnp.int32)
    tgt2d = tgt.reshape(1, B)

    def in_index_map(p, i):
        # Clamp so the DMA always stays in range; overhanging tiles are masked in-kernel.
        return (0, jnp.minimum(p * tiles_per_partial + i, n_tiles - 1))

    kernel = functools.partial(
        _focal_loss_kernel,
        alpha=None if alpha is None else float(alpha),
        gamma=float(gamma),
        batch=B,
        tiles_per_partial=tiles_per_partial,
    )

    out = pl.pallas_call(
        kernel,
        out_shape=jax.ShapeDtypeStruct((num_partials, 1, 128), jnp.float32),
        grid=(num_partials, tiles_per_partial),
        in_specs=[
            pl.BlockSpec((C, tb), in_index_map),        # pred tile   (C, TB)
            pl.BlockSpec((1, tb), in_index_map),        # target tile (1, TB)
        ],
        # Per-partial (1, 1, 128) VMEM row so each core writes back only its own block.
        out_specs=pl.BlockSpec((1, 1, 128), lambda p, i: (p, 0, 0)),
        compiler_params=pltpu.CompilerParams(
            dimension_semantics=("parallel", "arbitrary"),
            vmem_limit_bytes=32 * 1024 * 1024,
            allow_input_fusion=[True, True],
        ),
    )(pred_t, tgt2d)
    return jnp.sum(out[:, 0, 0]) / jnp.float32(B)


def _reference(pred, target, alpha=ALPHA, gamma=GAMMA):
    logp = jax.nn.log_softmax(pred.astype(jnp.float32), axis=-1)
    ce = -jnp.take_along_axis(logp, target[:, None], axis=-1)[:, 0]
    p_t = jnp.exp(-ce)
    focal = (1.0 - p_t) ** gamma * ce
    if alpha is not None and alpha >= 0:
        tgt_f = target.astype(jnp.float32)
        alpha_t = alpha * tgt_f + (1.0 - alpha) * (1.0 - tgt_f)
        focal = alpha_t * focal
    return jnp.mean(focal)


if __name__ == "__main__":
    key = jax.random.PRNGKey(0)
    k1, k2, k3, k4, k5, k6 = jax.random.split(key, 6)

    # Small shape consistent with the module: (B, num_classes) logits + integer labels.
    B, NUM_CLASSES = 8, 4
    pred = jax.random.normal(k1, (B, NUM_CLASSES), dtype=jnp.float32)
    target = jax.random.randint(k2, (B,), 0, NUM_CLASSES, dtype=jnp.int32)
    loss = focal_loss(pred, target)
    jax.block_until_ready(loss)
    ref = _reference(pred, target)
    assert jnp.allclose(loss, ref, atol=1e-5, rtol=1e-5), (loss, ref)

    # Multi-tile grid with a ragged (unpadded) last tile and native bf16 DMA.
    B2, C2 = 200, 4
    pred2 = jax.random.normal(k3, (B2, C2), dtype=jnp.bfloat16)
    target2 = jax.random.randint(k4, (B2,), 0, C2, dtype=jnp.int32)
    loss2 = focal_loss(pred2, target2, tile=128)
    jax.block_until_ready(loss2)
    ref2 = _reference(pred2, target2)
    assert jnp.allclose(loss2, ref2, atol=1e-4, rtol=1e-3), (loss2, ref2)

    # Odd tile count: exercises the clamped, fully-masked overhang tile of the
    # two-partial split (partial 1 re-reads the last tile but masks it out completely).
    B3, C3 = 300, 4
    pred3 = jax.random.normal(k5, (B3, C3), dtype=jnp.float32)
    target3 = jax.random.randint(k6, (B3,), 0, C3, dtype=jnp.int32)
    loss3 = focal_loss(pred3, target3, tile=128)
    jax.block_until_ready(loss3)
    ref3 = _reference(pred3, target3)
    assert jnp.allclose(loss3, ref3, atol=2e-5, rtol=1e-4), (loss3, ref3)

    print("KERNEL_OK")
</pallas_src>

<mosaic_0001>
module attributes {stable_mosaic.version = 11 : i64} {
  func.func @_focal_loss_kernel(%arg0: i32, %arg1: i32, %arg2: memref<4x128xf32, #tpu.memory_space<vmem>>, %arg3: memref<1x128xi32, #tpu.memory_space<vmem>>, %arg4: memref<1x1x128xf32, #tpu.memory_space<vmem>>) attributes {dimension_semantics = [#tpu.dimension_semantics<parallel>, #tpu.dimension_semantics<arbitrary>], iteration_bounds = array<i64: 2, 1>, scalar_prefetch = 0 : i64, scratch_operands = 0 : i64, tpu.core_type = #tpu.core_type<tc>, window_params = [{transform_indices = @transform_0, window_bounds = array<i64: 4, 128>}, {transform_indices = @transform_1, window_bounds = array<i64: 1, 128>}, {transform_indices = @transform_2, window_bounds = array<i64: 1, 1, 128>}]} {
    %c0_i32 = arith.constant 0 : i32
    %0 = arith.cmpi eq, %arg1, %c0_i32 : i32
    %1 = arith.extui %0 : i1 to i32
    %c0_i32_0 = arith.constant 0 : i32
    %2 = arith.cmpi ne, %1, %c0_i32_0 : i32
    scf.if %2 {
      %cst_21 = arith.constant 0.000000e+00 : f32
      %70 = vector.broadcast %cst_21 : f32 to vector<1x1x128xf32>
      %c0_22 = arith.constant 0 : index
      %c0_23 = arith.constant 0 : index
      %c0_24 = arith.constant 0 : index
      %71 = vector.load %arg4[%c0_22, %c0_23, %c0_24] : memref<1x1x128xf32, #tpu.memory_space<vmem>>, vector<1x1x128xf32>
      tpu.vector_store %arg4[%c0_22, %c0_23, %c0_24], %70 {strides = array<i32>} : memref<1x1x128xf32, #tpu.memory_space<vmem>>, vector<1x1x128xf32>,
    } else {
    }
    %c0 = arith.constant 0 : index
    %c0_1 = arith.constant 0 : index
    %3 = vector.load %arg2[%c0, %c0_1] : memref<4x128xf32, #tpu.memory_space<vmem>>, vector<4x128xf32>
    %c0_2 = arith.constant 0 : index
    %c0_3 = arith.constant 0 : index
    %4 = vector.load %arg3[%c0_2, %c0_3] : memref<1x128xi32, #tpu.memory_space<vmem>>, vector<1x128xi32>
    %c1_i32 = arith.constant 1 : i32
    %5 = arith.muli %arg0, %c1_i32 : i32
    %6 = arith.addi %5, %arg1 : i32
    %7 = tpu.iota {dimensions = array<i32: 1>} : vector<1x128xi32>
    %c128_i32 = arith.constant 128 : i32
    %8 = arith.muli %6, %c128_i32 : i32
    %9 = vector.broadcast %8 : i32 to vector<1x128xi32>
    %10 = arith.addi %7, %9 : vector<1x128xi32>
    %c8_i32 = arith.constant 8 : i32
    %11 = vector.broadcast %c8_i32 : i32 to vector<1x128xi32>
    %12 = arith.cmpi slt, %10, %11 : vector<1x128xi32>
    %cst = arith.constant 0.000000e+00 : f32
    %13 = vector.shape_cast %12 : vector<1x128xi1> to vector<1x128xi1>
    %14 = vector.broadcast %13 : vector<1x128xi1> to vector<4x128xi1>
    %15 = vector.broadcast %cst : f32 to vector<4x128xf32>
    %16 = arith.select %14, %3, %15 : vector<4x128xi1>, vector<4x128xf32>
    %c0_i32_4 = arith.constant 0 : i32
    %17 = vector.broadcast %c0_i32_4 : i32 to vector<1x128xi32>
    %18 = arith.select %12, %4, %17 : vector<1x128xi1>, vector<1x128xi32>
    %cst_5 = arith.constant dense<0xFF800000> : vector<128xf32>
    %19 = vector.multi_reduction <maximumf>, %16, %cst_5 [0] : vector<4x128xf32> to vector<128xf32>
    %20 = vector.shape_cast %19 : vector<128xf32> to vector<1x128xf32>
    %21 = vector.broadcast %20 : vector<1x128xf32> to vector<4x128xf32>
    %22 = arith.subf %16, %21 : vector<4x128xf32>
    %23 = math.exp %22 : vector<4x128xf32>
    %cst_6 = arith.constant dense<0.000000e+00> : vector<128xf32>
    %24 = vector.multi_reduction <add>, %23, %cst_6 [0] : vector<4x128xf32> to vector<128xf32>
    %25 = vector.shape_cast %24 : vector<128xf32> to vector<1x128xf32>
    %26 = vector.extract_strided_slice %16 {offsets = [0, 0], sizes = [1, 128], strides = [1, 1]} : vector<4x128xf32> to vector<1x128xf32>
    %c1_i32_7 = arith.constant 1 : i32
    %27 = vector.broadcast %c1_i32_7 : i32 to vector<1x128xi32>
    %28 = arith.cmpi eq, %18, %27 : vector<1x128xi32>
    %29 = vector.extract_strided_slice %16 {offsets = [1, 0], sizes = [1, 128], strides = [1, 1]} : vector<4x128xf32> to vector<1x128xf32>
    %30 = arith.select %28, %29, %26 : vector<1x128xi1>, vector<1x128xf32>
    %c2_i32 = arith.constant 2 : i32
    %31 = vector.broadcast %c2_i32 : i32 to vector<1x128xi32>
    %32 = arith.cmpi eq, %18, %31 : vector<1x128xi32>
    %33 = vector.extract_strided_slice %16 {offsets = [2, 0], sizes = [1, 128], strides = [1, 1]} : vector<4x128xf32> to vector<1x128xf32>
    %34 = arith.select %32, %33, %30 : vector<1x128xi1>, vector<1x128xf32>
    %c3_i32 = arith.constant 3 : i32
    %35 = vector.broadcast %c3_i32 : i32 to vector<1x128xi32>
    %36 = arith.cmpi eq, %18, %35 : vector<1x128xi32>
    %37 = vector.extract_strided_slice %16 {offsets = [3, 0], sizes = [1, 128], strides = [1, 1]} : vector<4x128xf32> to vector<1x128xf32>
    %38 = arith.select %36, %37, %34 : vector<1x128xi1>, vector<1x128xf32>
    %39 = arith.subf %38, %20 : vector<1x128xf32>
    %40 = math.exp %39 : vector<1x128xf32>
    %41 = math.log %25 : vector<1x128xf32>
    %42 = arith.subf %38, %20 : vector<1x128xf32>
    %43 = arith.subf %41, %42 : vector<1x128xf32>
    %44 = arith.divf %40, %25 : vector<1x128xf32>
    %cst_8 = arith.constant 1.000000e+00 : f32
    %45 = vector.broadcast %cst_8 : f32 to vector<1x128xf32>
    %46 = arith.subf %45, %44 : vector<1x128xf32>
    %cst_9 = arith.constant 0.000000e+00 : f32
    %47 = vector.broadcast %cst_9 : f32 to vector<1x128xf32>
    %48 = arith.maximumf %46, %47 : vector<1x128xf32>
    %49 = arith.mulf %48, %48 : vector<1x128xf32>
    %50 = arith.mulf %49, %43 : vector<1x128xf32>
    %51 = arith.sitofp %18 : vector<1x128xi32> to vector<1x128xf32>
    %cst_10 = arith.constant 2.500000e-01 : f32
    %52 = vector.broadcast %cst_10 : f32 to vector<1x128xf32>
    %53 = arith.mulf %52, %51 : vector<1x128xf32>
    %cst_11 = arith.constant 1.000000e+00 : f32
    %54 = vector.broadcast %cst_11 : f32 to vector<1x128xf32>
    %55 = arith.subf %54, %51 : vector<1x128xf32>
    %cst_12 = arith.constant 7.500000e-01 : f32
    %56 = vector.broadcast %cst_12 : f32 to vector<1x128xf32>
    %57 = arith.mulf %56, %55 : vector<1x128xf32>
    %58 = arith.addf %53, %57 : vector<1x128xf32>
    %59 = arith.mulf %58, %50 : vector<1x128xf32>
    %cst_13 = arith.constant 0.000000e+00 : f32
    %60 = vector.broadcast %cst_13 : f32 to vector<1x128xf32>
    %61 = arith.select %12, %59, %60 : vector<1x128xi1>, vector<1x128xf32>
    %62 = vector.shape_cast %61 : vector<1x128xf32> to vector<1x1x128xf32>
    %cst_14 = arith.constant dense<0.000000e+00> : vector<1xf32>
    %63 = vector.multi_reduction <add>, %62, %cst_14 [1, 2] : vector<1x1x128xf32> to vector<1xf32>
    %64 = vector.shape_cast %63 : vector<1xf32> to vector<1x1x1xf32>
    %65 = vector.extract %64[0, 0, 0] : f32 from vector<1x1x1xf32>
    %c0_15 = arith.constant 0 : index
    %c0_16 = arith.constant 0 : index
    %c0_17 = arith.constant 0 : index
    %66 = vector.load %arg4[%c0_15, %c0_16, %c0_17] : memref<1x1x128xf32, #tpu.memory_space<vmem>>, vector<1x1x128xf32>
    %67 = vector.broadcast %65 : f32 to vector<1x1x128xf32>
    %68 = arith.addf %66, %67 : vector<1x1x128xf32>
    %c0_18 = arith.constant 0 : index
    %c0_19 = arith.constant 0 : index
    %c0_20 = arith.constant 0 : index
    %69 = vector.load %arg4[%c0_18, %c0_19, %c0_20] : memref<1x1x128xf32, #tpu.memory_space<vmem>>, vector<1x1x128xf32>
    tpu.vector_store %arg4[%c0_18, %c0_19, %c0_20], %68 {strides = array<i32>} : memref<1x1x128xf32, #tpu.memory_space<vmem>>, vector<1x1x128xf32>,
    return
  }
  func.func @transform_0(%arg0: i32, %arg1: i32) -> (i32, i32) {
    %c1_i32 = arith.constant 1 : i32
    %0 = arith.muli %arg0, %c1_i32 : i32
    %1 = arith.addi %0, %arg1 : i32
    %c0_i32 = arith.constant 0 : i32
    %2 = arith.minsi %1, %c0_i32 : i32
    %c0_i32_0 = arith.constant 0 : i32
    %c0_i32_1 = arith.constant 0 : i32
    return %c0_i32_0, %2 : i32, i32
  }
  func.func @transform_1(%arg0: i32, %arg1: i32) -> (i32, i32) {
    %c1_i32 = arith.constant 1 : i32
    %0 = arith.muli %arg0, %c1_i32 : i32
    %1 = arith.addi %0, %arg1 : i32
    %c0_i32 = arith.constant 0 : i32
    %2 = arith.minsi %1, %c0_i32 : i32
    %c0_i32_0 = arith.constant 0 : i32
    %c0_i32_1 = arith.constant 0 : i32
    return %c0_i32_0, %2 : i32, i32
  }
  func.func @transform_2(%arg0: i32, %arg1: i32) -> (i32, i32, i32) {
    %c0_i32 = arith.constant 0 : i32
    %c0_i32_0 = arith.constant 0 : i32
    %c0_i32_1 = arith.constant 0 : i32
    return %arg0, %c0_i32, %c0_i32_0 : i32, i32, i32
  }
}

</mosaic_0001>

<llo_original>
// kernel: tpu_custom_call.1
$region0: #{tpu_custom_call.1}
  #allocation0 [shape = 'u32[]', space=smem, size = 0x4, offset = 0x4, fixed_abs, tag = 'smem constant byte address 0x4 - core index']
  #allocation1 [shape = 'u32[72,128]{1,0:T(1,128)}', space=vmem, size = 0x9000, scoped, tag = 'internal scratch']
  %s0 = inlined_call_operand.hbm [shape: f32[4,8], index: 0, kind: input, shape index: {}]
  %s1 = inlined_call_operand.hbm [shape: s32[1,8], index: 1, kind: input, shape index: {}]
  %s2 = inlined_call_operand.hbm [shape: f32[2,1,128], index: 2, kind: output, shape index: {}]
  %s3 = sld [smem:[#allocation0]]
  $region53: #{tpu_custom_call.1} parent=0
    _
  %s5 = ssub.s32 1, %s3
  %s6 = scalar_select 0, %s5, %s3
  $region1: #{tpu_custom_call.1} parent=0
    #allocation2 [shape = 'u8[4096]{0}', space=vmem, size = 0x1000, scoped, tag = 'input window, operand 0']
    #allocation3 [shape = 's32[2]{0}', space=sflag, size = 0x8, scoped, tag = 'scoped memory for tpu_custom_call.1']
    #allocation4 [shape = 's32[2]{0}', space=sflag, size = 0x8, scoped, tag = 'scoped memory for tpu_custom_call.1']
    #allocation5 [shape = 'u8[1024]{0}', space=vmem, size = 0x400, scoped, tag = 'input window, operand 1']
    #allocation6 [shape = 's32[2]{0}', space=sflag, size = 0x8, scoped, tag = 'scoped memory for tpu_custom_call.1']
    #allocation7 [shape = 'u8[1024]{0}', space=vmem, size = 0x400, scoped, tag = 'output window, operand 0']
    %7 = vsyncpa [#allocation3], 0
    %s8 = scalar_lea.sflag [#allocation3], 1
    %9 = vsyncpa %s8, 0
    %10 = vsyncpa [#allocation6], 0
    %s11 = scalar_lea.sflag [#allocation6], 1
    %12 = vsyncpa %s11, 0
    %13 = vsyncpa [#allocation4], 0
    %s14 = scalar_lea.sflag [#allocation4], 1
    %15 = vsyncpa %s14, 0
    loop: start=0, step=1, limit=4
    $region2: #{tpu_custom_call.1} parent=1 // loop_pre_header
      _
    $region3: #{tpu_custom_call.1} parent=1 // loop_header
      %s17 = sphi 0, %s21
      %p18 = scmp.ge.s32.totalorder %s17, 4
      %s24 = sphi 0, %s36
      %s25 = sphi 0, %s32
      %s26 = sphi 0, %s24
      %s27 = sphi 0, %s25
      %s28 = sphi 0, %s26
      %s29 = sphi 0, %s27
      %s45 = sphi 0, %s47
      %s48 = sphi 0, %s45
      %s49 = sphi 0, %s48
      %s65 = sphi 0, %s49
      %s77 = sphi 0, %s79
      %s80 = sphi 0, %s77
      %s81 = sphi 0, %s80
      %s97 = sphi 0, %s81
      %s103 = sphi 0, %s105
      %s106 = sphi 0, %s103
      %s107 = sphi 0, %s106
      %s123 = sphi 0, %s107
    $region4: #{tpu_custom_call.1} parent=1 // loop_header_branch
      %20 = sbr.rel (%p18) target = $region8
    $region5: #{tpu_custom_call.1} parent=1 // loop_body
      %s22 = ssub.s32 %s17, 1
      %s23 = ssub.s32 %s17, 2
      %s30 = sadd.s32 1, %s25
      %p31 = scmp.ge.s32.totalorder %s30, 1
      %s32 = scalar_select %p31, 0, %s30
      %s33 = sadd.s32 1, %s24
      %s34 = scalar_select %p31, %s33, %s24
      %p35 = scmp.ge.s32.totalorder %s34, 2
      %s36 = scalar_select %p35, 0, %s34
      %s37 = sadd.s32 %s24, %s25
      %p38 = scmp.lt.s32.totalorder %s37, 0
      %s39 = scalar_select %p38, %s37, 0
      %s40 = sadd.s32 %s36, %s32
      %p41 = scmp.lt.s32.totalorder %s40, 0
      %s42 = scalar_select %p41, %s40, 0
      %s43 = ssub.s32 %s39, %s42
      %p44 = scmp.eq.s32.totalorder %s43, 0
      %s46 = sadd.s32 %s45, 1
      %s47 = scalar_select %p44, %s45, %s46
      %p50 = pneg %p44
      %p51 = scmp.eq.s32.totalorder %s17, 1
      %p52 = por %p50, %p51
      %p53 = scmp.ne.s32.totalorder %s45, %s48
      %p54 = scmp.eq.s32.totalorder %s17, 0
      %p55 = por %p53, %p54
      %p56 = scmp.ne.s32.totalorder %s45, %s48
      %p57 = scmp.eq.s32.totalorder %s22, 1
      %p58 = por %p56, %p57
      %p59 = scmp.ne.s32.totalorder %s48, %s49
      %p60 = scmp.eq.s32.totalorder %s22, 0
      %p61 = por %p59, %p60
      %p62 = scmp.ne.s32.totalorder %s48, %s49
      %p63 = scmp.eq.s32.totalorder %s23, 1
      %p64 = por %p62, %p63
      %p66 = scmp.ne.s32.totalorder %s49, %s65
      %p67 = scmp.eq.s32.totalorder %s23, 0
      %p68 = por %p66, %p67
      %s69 = sadd.s32 %s24, %s25
      %p70 = scmp.lt.s32.totalorder %s69, 0
      %s71 = scalar_select %p70, %s69, 0
      %s72 = sadd.s32 %s36, %s32
      %p73 = scmp.lt.s32.totalorder %s72, 0
      %s74 = scalar_select %p73, %s72, 0
      %s75 = ssub.s32 %s71, %s74
      %p76 = scmp.eq.s32.totalorder %s75, 0
      %s78 = sadd.s32 %s77, 1
      %s79 = scalar_select %p76, %s77, %s78
      %p82 = pneg %p76
      %p83 = scmp.eq.s32.totalorder %s17, 1
      %p84 = por %p82, %p83
      %p85 = scmp.ne.s32.totalorder %s77, %s80
      %p86 = scmp.eq.s32.totalorder %s17, 0
      %p87 = por %p85, %p86
      %p88 = scmp.ne.s32.totalorder %s77, %s80
      %p89 = scmp.eq.s32.totalorder %s22, 1
      %p90 = por %p88, %p89
      %p91 = scmp.ne.s32.totalorder %s80, %s81
      %p92 = scmp.eq.s32.totalorder %s22, 0
      %p93 = por %p91, %p92
      %p94 = scmp.ne.s32.totalorder %s80, %s81
      %p95 = scmp.eq.s32.totalorder %s23, 1
      %p96 = por %p94, %p95
      %p98 = scmp.ne.s32.totalorder %s81, %s97
      %p99 = scmp.eq.s32.totalorder %s23, 0
      %p100 = por %p98, %p99
      %s101 = ssub.s32 %s24, %s36
      %p102 = scmp.eq.s32.totalorder %s101, 0
      %s104 = sadd.s32 %s103, 1
      %s105 = scalar_select %p102, %s103, %s104
      %p108 = pneg %p102
      %p109 = scmp.eq.s32.totalorder %s17, 1
      %p110 = por %p108, %p109
      %p111 = scmp.ne.s32.totalorder %s103, %s106
      %p112 = scmp.eq.s32.totalorder %s17, 0
      %p113 = por %p111, %p112
      %p114 = scmp.ne.s32.totalorder %s103, %s106
      %p115 = scmp.eq.s32.totalorder %s22, 1
      %p116 = por %p114, %p115
      %p117 = scmp.ne.s32.totalorder %s106, %s107
      %p118 = scmp.eq.s32.totalorder %s22, 0
      %p119 = por %p117, %p118
      %p120 = scmp.ne.s32.totalorder %s106, %s107
      %p121 = scmp.eq.s32.totalorder %s23, 1
      %p122 = por %p120, %p121
      %p124 = scmp.ne.s32.totalorder %s107, %s123
      %p125 = scmp.eq.s32.totalorder %s23, 0
      %p126 = por %p124, %p125
      %p127 = scmp.le.s32.totalorder 1, %s17
      %p128 = scmp.lt.s32.totalorder %s17, 3
      %p129 = pnand %p127, %p128
      %p130 = pneg %p129
      // Predicated region
      $region9: #{tpu_custom_call.1} parent=5 // pred_check
        _
      $region10: #{tpu_custom_call.1} parent=5 // pred_check_branch
        %132 = sbr.rel (%p129) target = $region12
      $region11: #{tpu_custom_call.1} parent=5 // pred_region
        %s133 = ssub.s32 %s17, 1
      $region12: #{tpu_custom_call.1} parent=5 // pred_fallthru
        _
      %p134 = scmp.lt.s32.totalorder %s17, 2
      // Predicated region
      $region13: #{tpu_custom_call.1} parent=5 // pred_check
        %p135 = pneg %p134
      $region14: #{tpu_custom_call.1} parent=5 // pred_check_branch
        %137 = sbr.rel (%p135) target = $region16
      $region15: #{tpu_custom_call.1} parent=5 // pred_region
        // Predicated region
        $region17: #{tpu_custom_call.1} parent=15 // pred_check
          %p138 = pneg %p55
        $region18: #{tpu_custom_call.1} parent=15 // pred_check_branch
          %140 = sbr.rel (%p138) target = $region20
        $region19: #{tpu_custom_call.1} parent=15 // pred_region
          %s141 = sand.u32 %s45, 1
          %s142 = scalar_lea.sflag [#allocation3], %s141
          %s143 = sand.u32 %s45, 1
          %s144 = smul.addr %s143, 4
          %s145 = scalar_lea.vmem [#allocation2], %s144
          %s146 = sadd.s32 %s24, %s25
          %p147 = scmp.lt.s32.totalorder %s146, 0
          %s148 = scalar_select %p147, %s146, 0
          %150 = vsyncadd %s142, 0
          %s151 = smul.addr %s148, 4
          %s152 = scalar_lea.hbm %s0, %s151
          %s154 = sshll.u32 %s152, 4
          %s155 = int_to_ptr.hbm [resolvable:$true] %s154
          %s156 = sshll.u32 %s145, 4
          %s157 = int_to_ptr.vmem [resolvable:$true] %s156
          %159 = dma.hbm_to_vmem [thread:$0]  %s155, 64, %s157, %s142
        $region20: #{tpu_custom_call.1} parent=15 // pred_fallthru
          _
        // Predicated region
        $region21: #{tpu_custom_call.1} parent=15 // pred_check
          %p160 = pneg %p87
        $region22: #{tpu_custom_call.1} parent=15 // pred_check_branch
          %162 = sbr.rel (%p160) target = $region24
        $region23: #{tpu_custom_call.1} parent=15 // pred_region
          %s163 = sand.u32 %s77, 1
          %s164 = scalar_lea.sflag [#allocation6], %s163
          %s165 = sand.u32 %s77, 1
          %s166 = scalar_lea.vmem [#allocation5], %s165
          %s167 = sadd.s32 %s24, %s25
          %p168 = scmp.lt.s32.totalorder %s167, 0
          %s169 = scalar_select %p168, %s167, 0
          %171 = vsyncadd %s164, 0
          %s172 = scalar_lea.hbm %s1, %s169
          %s174 = sshll.u32 %s172, 4
          %s175 = int_to_ptr.hbm [resolvable:$true] %s174
          %s176 = sshll.u32 %s166, 4
          %s177 = int_to_ptr.vmem [resolvable:$true] %s176
          %179 = dma.hbm_to_vmem [thread:$0]  %s175, 16, %s177, %s164
        $region24: #{tpu_custom_call.1} parent=15 // pred_fallthru
          _
      $region16: #{tpu_custom_call.1} parent=5 // pred_fallthru
        _
      %p180 = scmp.le.s32.totalorder 1, %s17
      %p181 = scmp.lt.s32.totalorder %s17, 3
      %p182 = pnand %p180, %p181
      %p183 = pneg %p182
      // Predicated region
      $region25: #{tpu_custom_call.1} parent=5 // pred_check
        _
      $region26: #{tpu_custom_call.1} parent=5 // pred_check_branch
        %185 = sbr.rel (%p182) target = $region28
      $region27: #{tpu_custom_call.1} parent=5 // pred_region
        %s186 = ssub.s32 %s17, 1
        %s187 = sand.u32 %s48, 1
        %s188 = scalar_lea.sflag [#allocation3], %s187
        %s189 = sand.u32 %s48, 1
        %s190 = smul.addr %s189, 4
        %s191 = scalar_lea.vmem [#allocation2], %s190
        // Predicated region
        $region29: #{tpu_custom_call.1} parent=27 // pred_check
          %p192 = pneg %p61
        $region30: #{tpu_custom_call.1} parent=27 // pred_check_branch
          %194 = sbr.rel (%p192) target = $region32
        $region31: #{tpu_custom_call.1} parent=27 // pred_region
          %196 = dma.done %s188, 64
        $region32: #{tpu_custom_call.1} parent=27 // pred_fallthru
          _
        %s197 = sand.u32 %s80, 1
        %s198 = scalar_lea.sflag [#allocation6], %s197
        %s199 = sand.u32 %s80, 1
        %s200 = scalar_lea.vmem [#allocation5], %s199
        // Predicated region
        $region33: #{tpu_custom_call.1} parent=27 // pred_check
          %p201 = pneg %p93
        $region34: #{tpu_custom_call.1} parent=27 // pred_check_branch
          %203 = sbr.rel (%p201) target = $region36
        $region35: #{tpu_custom_call.1} parent=27 // pred_region
          %205 = dma.done %s198, 16
        $region36: #{tpu_custom_call.1} parent=27 // pred_fallthru
          _
        %s206 = sand.u32 %s48, 1
        %s207 = scalar_lea.sflag [#allocation3], %s206
        %s208 = sand.u32 %s48, 1
        %s209 = smul.addr %s208, 4
        %s210 = scalar_lea.vmem [#allocation2], %s209
        %p211 = pneg %p61
        %p212 = pneg %p58
        %s213 = sand.u32 %s80, 1
        %s214 = scalar_lea.sflag [#allocation6], %s213
        %s215 = sand.u32 %s80, 1
        %s216 = scalar_lea.vmem [#allocation5], %s215
        %p217 = pneg %p93
        %p218 = pneg %p90
        %p219 = pneg %p119
        %p220 = pneg %p116
        %s221 = sand.u32 %s106, 1
        %s222 = scalar_lea.sflag [#allocation4], %s221
        %s223 = sand.u32 %s106, 1
        %s224 = scalar_lea.vmem [#allocation7], %s223
        %s225 = sadd.s32 %s26, %s27
        %p226 = scmp.lt.s32.totalorder %s225, 0
        %s227 = scalar_select %p226, %s225, 0
        %s228 = sadd.s32 %s26, %s27
        %p229 = scmp.lt.s32.totalorder %s228, 0
        %s230 = scalar_select %p229, %s228, 0
        %p231 = scmp.eq.s32.totalorder %s27, 0
        // Predicated region
        $region37: #{tpu_custom_call.1} parent=27 // pred_check
          %p232 = pneg %p231
        $region38: #{tpu_custom_call.1} parent=27 // pred_check_branch
          %234 = sbr.rel (%p232) target = $region40
        $region39: #{tpu_custom_call.1} parent=27 // pred_region
          %235 = vst [vmem:[%s224] sm:$0x1] 0.0
        $region40: #{tpu_custom_call.1} parent=27 // pred_fallthru
          _
        %v236 = vld [vmem:[%s191] sm:$0xf]
        %v237 = vld [vmem:[%s200] sm:$0x1]
        %s238 = sadd.s32 %s26, %s27
        %v239 = vlaneseq
        %v240 = vand.u32 %v239, 127
        %s241 = smul.u32 %s238, 128
        %v242 = vstv %s241
        %v243 = vadd.s32 %v240, %v242
        %vm244 = vcmp.lt.s32.totalorder %v243, 8
        %v245 = vsel %vm244, 1, 0
        %vm246 = vcmp.eq.s32.totalorder %v245, 1
        %v247 = vsel %vm246, %v236, 0.0
        %v248 = vsel %vm244, %v237, 0
        %vm249 = vcmask 1043456
        %v250 = vsel %vm249, %v247, -inf
        %v251 = vrot.slane %v250, 4
        %v252 = vmax.f32 %v250, %v251
        %v253 = vrot.slane %v252, 2
        %v254 = vmax.f32 %v252, %v253
        %v255 = vrot.slane %v254, 1
        %v256 = vmax.f32 %v254, %v255
        %v257 = vsub.f32 %v247, %v256
        %v258 = vmul.f32 %v257, 1.442695
        %v259 = vpow.pop %v258
        %v260 = vsel %vm249, %v259, 0.0
        %v261 = vrot.slane %v260, 4
        %v262 = vadd.f32 %v260, %v261
        %v263 = vrot.slane %v262, 2
        %v264 = vadd.f32 %v262, %v263
        %v265 = vrot.slane %v264, 1
        %v266 = vadd.f32 %v264, %v265
        %vm267 = vcmp.eq.s32.totalorder %v248, 1
        %v269 = vrot.slane %v247, 1
        %v271 = vsel %vm267, %v269, %v247
        %vm272 = vcmp.eq.s32.totalorder %v248, 2
        %v273 = vrot.slane %v247, 2
        %v275 = vsel %vm272, %v273, %v271
        %vm276 = vcmp.eq.s32.totalorder %v248, 3
        %v277 = vrot.slane %v247, 3
        %v279 = vsel %vm276, %v277, %v275
        %v280 = vsub.f32 %v279, %v256
        %v281 = vmul.f32 %v280, 1.442695
        %v282 = vpow.pop %v281
        %v283 = vlog2.pop %v266
        %v284 = vmul.f32 %v283, 0.6931472
        %v285 = vsub.f32 %v284, %v280
        %v286 = vrcp.pop %v266
        %v287 = vmul.f32 %v266, %v286
        %v288 = vsub.f32 1.0, %v287
        %v289 = vmul.f32 %v286, %v288
        %v290 = vadd.f32 %v286, %v289
        %vm291 = vweird.f32 %v266
        %vm292 = vweird.f32 %v286
        %vm293 = vmor %vm291, %vm292
        %v294 = vsel %vm293, %v286, %v290
        %v295 = vand.u32 2147483647, %v266
        %vm296 = vcmp.eq.f32.partialorder %v295, 8.507059e+37
        %v297 = vand.u32 %v266, 2147483648
        %v298 = vor.u32 1.1754944e-38, %v297
        %v299 = vsel %vm296, %v298, %v294
        %v300 = vmul.f32 %v282, %v299
        %v301 = vsub.f32 1.0, %v300
        %v302 = vmax.f32 %v301, 0.0
        %v303 = vmul.f32 %v302, %v302
        %v304 = vmul.f32 %v303, %v285
        %v305 = vcvt.s32.f32 %v248
        %v306 = vmul.f32 %v305, 0.25
        %v307 = vsub.f32 1.0, %v305
        %v308 = vmul.f32 %v307, 0.75
        %v309 = vadd.f32 %v306, %v308
        %v310 = vmul.f32 %v309, %v304
        %v311 = vsel %vm244, %v310, 0.0
        %vm312 = vcmask 1040384
        %v313 = vsel %vm312, %v311, 0.0
        %314 = vadd.xlane.f32.xlu0 %v313
        %v315 = vpop.xlane.xlu0 %314
        %v316 = vrot.slane %v315, 4
        %v317 = vadd.f32 %v315, %v316
        %v318 = vrot.slane %v317, 2
        %v319 = vadd.f32 %v317, %v318
        %v320 = vrot.slane %v319, 1
        %v321 = vadd.f32 %v319, %v320
        %s322 = vtos %v321
        %v323 = vld [vmem:[%s224] sm:$0x1]
        %v324 = vstv %s322
        %v325 = vadd.f32 %v323, %v324
        %326 = vst [vmem:[%s224] sm:$0x1] %v325
        %s327 = sand.u32 %s106, 1
        %s328 = scalar_lea.sflag [#allocation4], %s327
        %s329 = sand.u32 %s106, 1
        %s330 = scalar_lea.vmem [#allocation7], %s329
        // Predicated region
        $region41: #{tpu_custom_call.1} parent=27 // pred_check
          %p331 = pneg %p116
        $region42: #{tpu_custom_call.1} parent=27 // pred_check_branch
          %333 = sbr.rel (%p331) target = $region44
        $region43: #{tpu_custom_call.1} parent=27 // pred_region
          %335 = vsyncadd %s328, 0
          %s336 = scalar_lea.hbm %s2, %s26
          %s338 = sshll.u32 %s330, 4
          %s339 = int_to_ptr.vmem [resolvable:$true] %s338
          %s340 = sshll.u32 %s336, 4
          %s341 = int_to_ptr.hbm [resolvable:$true] %s340
          %343 = dma.vmem_to_hbm [thread:$0]  %s339, 16, %s341, %s328
        $region44: #{tpu_custom_call.1} parent=27 // pred_fallthru
          _
      $region28: #{tpu_custom_call.1} parent=5 // pred_fallthru
        _
      %p344 = scmp.le.s32.totalorder 2, %s17
      // Predicated region
      $region45: #{tpu_custom_call.1} parent=5 // pred_check
        %p345 = pneg %p344
      $region46: #{tpu_custom_call.1} parent=5 // pred_check_branch
        %347 = sbr.rel (%p345) target = $region48
      $region47: #{tpu_custom_call.1} parent=5 // pred_region
        %s348 = ssub.s32 %s17, 2
        // Predicated region
        $region49: #{tpu_custom_call.1} parent=47 // pred_check
          %p349 = pneg %p122
        $region50: #{tpu_custom_call.1} parent=47 // pred_check_branch
          %351 = sbr.rel (%p349) target = $region52
        $region51: #{tpu_custom_call.1} parent=47 // pred_region
          %s352 = sand.u32 %s107, 1
          %s353 = scalar_lea.sflag [#allocation4], %s352
          %s354 = sand.u32 %s107, 1
          %s355 = scalar_lea.vmem [#allocation7], %s354
          %357 = dma.done %s353, 16
        $region52: #{tpu_custom_call.1} parent=47 // pred_fallthru
          _
      $region48: #{tpu_custom_call.1} parent=5 // pred_fallthru
        _
    $region6: #{tpu_custom_call.1} parent=1 // loop_footer
      %s21 = sadd.s32 1, %s17
    $region7: #{tpu_custom_call.1} parent=1 // loop_footer_branch
      %16 = sbr.rel target = $region3
    $region8: #{tpu_custom_call.1} parent=1 // loop_exit
      _
    %358 = vsyncpa [#allocation3], 1
    %s359 = scalar_lea.sflag [#allocation3], 1
    %360 = vsyncpa %s359, 1
    %361 = vsyncpa [#allocation6], 1
    %s362 = scalar_lea.sflag [#allocation6], 1
    %363 = vsyncpa %s362, 1
    %364 = vsyncpa [#allocation4], 1
    %s365 = scalar_lea.sflag [#allocation4], 1
    %366 = vsyncpa %s365, 1

</llo_original>
